<compile_context>
chip_gen: v6e
topology: v6e:2x2x1
jax: 0.10.0
libtpu: 0.0.40
codegen_flags: <defaults>
</compile_context>

<pallas_src>
import functools

import jax
import jax.numpy as jnp
from jax import lax
from jax.experimental import pallas as pl
from jax.experimental.pallas import tpu as pltpu

_LANE = 128


def _round_up(x: int, m: int) -> int:
    return (x + m - 1) // m * m


def _sublane(dtype) -> int:
    # f32 -> 8, bf16 -> 16, int8/fp8 -> 32 rows per vreg sublane group.
    return max(8, 32 // jnp.dtype(dtype).itemsize)


def _pick_tile(dim: int, max_tile: int, align: int) -> int:
    """Largest tile (multiple of `align`, <= max_tile) minimizing padding of dim."""
    dim_a = _round_up(dim, align)
    if dim_a <= max_tile:
        return dim_a
    min_pad = dim_a - dim
    best_t, best_pad = align, None
    t = max_tile // align * align
    while t >= align:
        pad = _round_up(dim, t) - dim
        if best_pad is None or pad < best_pad:
            best_t, best_pad = t, pad
        if pad == min_pad:          # largest tile achieving the minimal padding
            break
        t -= align
    return best_t


def _largest_dividing_tile(total: int, max_tile: int, align: int) -> int:
    """Largest multiple of `align` <= max_tile that divides `total` (total % align == 0)."""
    t = max(align, max_tile // align * align)
    while t > align:
        if total % t == 0:
            return t
        t -= align
    return align


def _make_linear_kernel(*, tk: int, x_is_panel: bool, single_k: bool,
                        accum_in_out: bool):
    def kernel(x_ref, w_ref, b_ref, o_ref, *scratch):
        k = pl.program_id(2)
        if x_is_panel:
            # x is a K-resident (tm, Kp) row panel, fetched once per M tile.
            start = pl.multiple_of(k * tk, tk)
            x_blk = x_ref[:, pl.ds(start, tk)]
        else:
            x_blk = x_ref[...]

        # out_tile += x_tile @ w_tile.T.  The transpose is folded into the
        # contraction dims (NT / q@k.T pattern), which Mosaic feeds straight
        # into the MXU without an explicit per-step vxpose of the weight tile.
        part = lax.dot_general(
            x_blk,
            w_ref[...],
            dimension_numbers=(((1,), (1,)), ((), ())),
            preferred_element_type=jnp.float32,
        )

        if single_k:
            # One reduction step: no accumulator needed at all.
            o_ref[...] = (part + b_ref[...].astype(jnp.float32)).astype(o_ref.dtype)
        elif accum_in_out:
            # f32 output: accumulate directly in the VMEM-resident output tile
            # (output block index is independent of k), bias folded into init.
            @pl.when(k == 0)
            def _():
                o_ref[...] = jnp.broadcast_to(b_ref[...], o_ref.shape).astype(o_ref.dtype)

            o_ref[...] += part.astype(o_ref.dtype)
        else:
            # Narrow output dtype: keep an f32 scratch accumulator.
            acc_ref = scratch[0]

            @pl.when(k == 0)
            def _():
                acc_ref[...] = jnp.zeros_like(acc_ref)

            acc_ref[...] += part

            @pl.when(k == pl.num_programs(2) - 1)
            def _():
                o_ref[...] = (acc_ref[...] + b_ref[...].astype(jnp.float32)).astype(o_ref.dtype)

    return kernel


@functools.partial(jax.jit, static_argnames=("tm", "tn", "tk", "x_panel_cap_bytes"))
def linear_forward(x, weight, bias, *, tm=512, tn=512, tk=512,
                   x_panel_cap_bytes=24 * 1024 * 1024):
    """out = x @ weight.T + bias, matching torch.nn.Linear.forward.

    x:      (B, inputSize)
    weight: (outputSize, inputSize)   -- PyTorch convention, NOT transposed here
    bias:   (outputSize,)
    """
    B, K = x.shape
    N, K_w = weight.shape
    assert K == K_w, "weight/input dim mismatch"
    out_dtype = x.dtype

    # --- tile selection (dtype-aware sublane, padding-minimizing) -----------
    sub = _sublane(x.dtype)
    tm = _pick_tile(B, max(tm, sub), sub)
    tk = _pick_tile(K, max(tk, _LANE), _LANE)
    tn = _pick_tile(N, max(tn, _LANE), _LANE)

    Bp, Kp, Np = _round_up(B, tm), _round_up(K, tk), _round_up(N, tn)
    grid_m, grid_n, grid_k = Bp // tm, Np // tn, Kp // tk

    # Megacore (v7x has 2 TensorCores): guarantee >= 2 parallel grid points
    # whenever the problem permits, otherwise one core idles.
    if grid_m * grid_n == 1:
        if Np >= 2 * _LANE:
            tn = _largest_dividing_tile(Np, Np // 2, _LANE)
        elif Bp >= 2 * sub:
            tm = _largest_dividing_tile(Bp, Bp // 2, sub)
        grid_m, grid_n = Bp // tm, Np // tn

    # --- zero-pad only when the shape is actually ragged --------------------
    # (For a real model, pad the weight once at init outside jit instead; here
    #  padding is already minimized by the tile picker.)
    if (Bp, Kp) != (B, K):
        x = jnp.pad(x, ((0, Bp - B), (0, Kp - K)))
    if (Np, Kp) != (N, K):
        weight = jnp.pad(weight, ((0, Np - N), (0, Kp - K)))
    if Np != N:
        bias = jnp.pad(bias, (0, Np - N))
    bias2d = bias.reshape(1, Np)

    # --- kernel variant selection -------------------------------------------
    x_item = jnp.dtype(x.dtype).itemsize
    w_item = jnp.dtype(weight.dtype).itemsize
    b_item = jnp.dtype(bias.dtype).itemsize
    o_item = jnp.dtype(out_dtype).itemsize

    single_k = grid_k == 1
    accum_in_out = (not single_k) and (jnp.dtype(out_dtype) == jnp.dtype(jnp.float32))
    # K-resident x row panel: fetch x once per M tile instead of once per
    # (N tile, K tile).  Only when it pays off and fits the VMEM budget
    # (double-buffered panel capped so the total stays well under v7x's 64 MiB).
    x_is_panel = (
        (not single_k)
        and grid_n > 1
        and 2 * tm * Kp * x_item <= x_panel_cap_bytes
    )

    if x_is_panel:
        x_spec = pl.BlockSpec((tm, Kp), lambda i, j, k: (i, 0))
    else:
        x_spec = pl.BlockSpec((tm, tk), lambda i, j, k: (i, k))
    w_spec = pl.BlockSpec((tn, tk), lambda i, j, k: (j, k))
    b_spec = pl.BlockSpec((1, tn), lambda i, j, k: (0, j))
    o_spec = pl.BlockSpec((tm, tn), lambda i, j, k: (i, j))

    scratch = []
    if (not single_k) and (not accum_in_out):
        scratch = [pltpu.VMEM((tm, tn), jnp.float32)]

    # --- VMEM budget / compiler params ---------------------------------------
    x_buf = tm * (Kp if x_is_panel else tk) * x_item
    vmem_needed = (
        2 * (x_buf + tn * tk * w_item + tn * b_item + tm * tn * o_item)
        + (tm * tn * 4 if scratch else 0)
    )
    # Raise past v5e's 16 MiB scoped default; cap safely below v7x's 64 MiB.
    vmem_limit = int(max(32 * 1024 * 1024,
                         min(vmem_needed + (4 << 20), 56 * 1024 * 1024)))

    flops = 2 * Bp * Kp * Np
    bytes_accessed = (
        Bp * Kp * x_item * (1 if x_is_panel else grid_n)  # x re-read per N tile
        + Np * Kp * w_item * grid_m                       # weight re-read per M tile
        + Np * b_item
        + Bp * Np * o_item
    )

    kernel = _make_linear_kernel(
        tk=tk, x_is_panel=x_is_panel, single_k=single_k, accum_in_out=accum_in_out
    )

    out_padded = pl.pallas_call(
        kernel,
        out_shape=jax.ShapeDtypeStruct((Bp, Np), out_dtype),
        grid_spec=pltpu.PrefetchScalarGridSpec(
            num_scalar_prefetch=0,
            grid=(grid_m, grid_n, grid_k),
            in_specs=[x_spec, w_spec, b_spec],
            out_specs=o_spec,
            scratch_shapes=scratch,
        ),
        compiler_params=pltpu.CompilerParams(
            dimension_semantics=("parallel", "parallel", "arbitrary"),
            vmem_limit_bytes=vmem_limit,
        ),
        cost_estimate=pl.CostEstimate(
            flops=flops, transcendentals=0, bytes_accessed=bytes_accessed
        ),
    )(x, weight, bias2d)

    if (Bp, Np) != (B, N):
        out_padded = out_padded[:B, :N]
    return out_padded


if __name__ == "__main__":
    # --- Test 1: small shapes consistent with linearRegression(inputSize, outputSize)
    inputSize, outputSize, batch = 32, 16, 8

    key = jax.random.PRNGKey(0)
    k_x, k_w, k_b = jax.random.split(key, 3)

    bound = 1.0 / jnp.sqrt(jnp.float32(inputSize))
    weight = jax.random.uniform(
        k_w, (outputSize, inputSize), jnp.float32, -bound, bound
    )
    bias = jax.random.uniform(k_b, (outputSize,), jnp.float32, -bound, bound)
    x = jax.random.normal(k_x, (batch, inputSize), jnp.float32)

    out = jax.block_until_ready(linear_forward(x, weight, bias))
    ref = x @ weight.T + bias
    assert out.shape == (batch, outputSize)
    assert jnp.allclose(out, ref, atol=1e-5, rtol=1e-5)

    # --- Test 2: multi-tile f32 path (K reduction, x panel, megacore split,
    #             f32 accumulate-in-output).
    kx2, kw2, kb2 = jax.random.split(jax.random.PRNGKey(1), 3)
    B2, K2, N2 = 512, 768, 384
    x2 = jax.random.normal(kx2, (B2, K2), jnp.float32)
    w2 = jax.random.normal(kw2, (N2, K2), jnp.float32) * 0.02
    b2 = jax.random.normal(kb2, (N2,), jnp.float32) * 0.02
    out2 = jax.block_until_ready(linear_forward(x2, w2, b2))
    ref2 = x2 @ w2.T + b2
    assert jnp.allclose(out2, ref2, atol=2e-3, rtol=2e-3)

    # --- Test 3: ragged batch, bf16 inputs (dtype-aware sublane, f32 scratch
    #             accumulator path, x panel).
    kx3, kw3, kb3 = jax.random.split(jax.random.PRNGKey(2), 3)
    B3, K3, N3 = 300, 1024, 256
    x3 = jax.random.normal(kx3, (B3, K3), jnp.float32).astype(jnp.bfloat16)
    w3 = (jax.random.normal(kw3, (N3, K3), jnp.float32) * 0.02).astype(jnp.bfloat16)
    b3 = (jax.random.normal(kb3, (N3,), jnp.float32) * 0.02).astype(jnp.bfloat16)
    out3 = jax.block_until_ready(linear_forward(x3, w3, b3))
    ref3 = (x3.astype(jnp.float32) @ w3.astype(jnp.float32).T
            + b3.astype(jnp.float32))
    assert out3.dtype == jnp.bfloat16
    assert jnp.allclose(out3.astype(jnp.float32), ref3, atol=2e-2, rtol=2e-2)

    print("KERNEL_OK")
</pallas_src>

<mosaic_0001>
module attributes {stable_mosaic.version = 11 : i64} {
  func.func @kernel(%arg0: i32, %arg1: i32, %arg2: i32, %arg3: memref<8x128xf32, #tpu.memory_space<vmem>>, %arg4: memref<128x128xf32, #tpu.memory_space<vmem>>, %arg5: memref<1x128xf32, #tpu.memory_space<vmem>>, %arg6: memref<8x128xf32, #tpu.memory_space<vmem>>) attributes {dimension_semantics = [#tpu.dimension_semantics<parallel>, #tpu.dimension_semantics<parallel>, #tpu.dimension_semantics<arbitrary>], iteration_bounds = array<i64: 1, 1, 1>, scalar_prefetch = 0 : i64, scratch_operands = 0 : i64, tpu.core_type = #tpu.core_type<tc>, window_params = [{transform_indices = @transform_0, window_bounds = array<i64: 8, 128>}, {transform_indices = @transform_1, window_bounds = array<i64: 128, 128>}, {transform_indices = @transform_2, window_bounds = array<i64: 1, 128>}, {transform_indices = @transform_3, window_bounds = array<i64: 8, 128>}]} {
    %c0 = arith.constant 0 : index
    %c0_0 = arith.constant 0 : index
    %0 = vector.load %arg3[%c0, %c0_0] : memref<8x128xf32, #tpu.memory_space<vmem>>, vector<8x128xf32>
    %c0_1 = arith.constant 0 : index
    %c0_2 = arith.constant 0 : index
    %1 = vector.load %arg4[%c0_1, %c0_2] : memref<128x128xf32, #tpu.memory_space<vmem>>, vector<128x128xf32>
    %cst = arith.constant dense<0.000000e+00> : vector<8x128xf32>
    %2 = tpu.matmul %0, %1, %cst {dimension_numbers = #tpu.dot_dimension_numbers<[1], [1], [0], [0], [0, 0, 1, 0], [], []>} : vector<8x128xf32>, vector<128x128xf32>, vector<8x128xf32> -> vector<8x128xf32>
    %c0_3 = arith.constant 0 : index
    %c0_4 = arith.constant 0 : index
    %3 = vector.load %arg5[%c0_3, %c0_4] : memref<1x128xf32, #tpu.memory_space<vmem>>, vector<1x128xf32>
    %4 = vector.broadcast %3 : vector<1x128xf32> to vector<8x128xf32>
    %5 = arith.addf %2, %4 : vector<8x128xf32>
    %c0_5 = arith.constant 0 : index
    %c0_6 = arith.constant 0 : index
    %6 = vector.load %arg6[%c0_5, %c0_6] : memref<8x128xf32, #tpu.memory_space<vmem>>, vector<8x128xf32>
    tpu.vector_store %arg6[%c0_5, %c0_6], %5 {strides = array<i32>} : memref<8x128xf32, #tpu.memory_space<vmem>>, vector<8x128xf32>,
    return
  }
  func.func @transform_0(%arg0: i32, %arg1: i32, %arg2: i32) -> (i32, i32) {
    %c0_i32 = arith.constant 0 : i32
    return %arg0, %arg2 : i32, i32
  }
  func.func @transform_1(%arg0: i32, %arg1: i32, %arg2: i32) -> (i32, i32) {
    %c0_i32 = arith.constant 0 : i32
    return %arg1, %arg2 : i32, i32
  }
  func.func @transform_2(%arg0: i32, %arg1: i32, %arg2: i32) -> (i32, i32) {
    %c0_i32 = arith.constant 0 : i32
    %c0_i32_0 = arith.constant 0 : i32
    return %c0_i32, %arg1 : i32, i32
  }
  func.func @transform_3(%arg0: i32, %arg1: i32, %arg2: i32) -> (i32, i32) {
    %c0_i32 = arith.constant 0 : i32
    return %arg0, %arg1 : i32, i32
  }
}

</mosaic_0001>

<llo_original>
// kernel: linear_forward.1
$region0: #{linear_forward.1}
  #allocation0 [shape = 'u32[]', space=smem, size = 0x4, offset = 0x4, fixed_abs, tag = 'smem constant byte address 0x4 - core index']
  #allocation1 [shape = 'u32[144,128]{1,0:T(1,128)}', space=vmem, size = 0x12000, scoped, tag = 'internal scratch']
  %s0 = inlined_call_operand.vmem [shape: f32[8,128], index: 0, kind: input, shape index: {}]
  %s1 = inlined_call_operand.vmem [shape: f32[128,128], index: 1, kind: input, shape index: {}]
  %s2 = inlined_call_operand.vmem [shape: f32[1,128], index: 2, kind: input, shape index: {}]
  %s3 = inlined_call_operand.hbm [shape: f32[8,128], index: 3, kind: output, shape index: {}]
  %s4 = sld [smem:[#allocation0]]
  $region22: #{linear_forward.1} parent=0
    _
  %s6 = ssub.s32 1, %s4
  %s7 = scalar_select 0, %s6, %s4
  $region1: #{linear_forward.1} parent=0
    #allocation2 [shape = 'u8[4096]{0}', space=vmem, size = 0x1000, scoped, tag = 'output window, operand 0, single buffered']
    #allocation3 [shape = 's32[1]{0}', space=sflag, size = 0x4, scoped, tag = 'scoped memory for linear_forward.1']
    %8 = vsyncpa [#allocation3], 0
    // Predicated region
    $region2: #{linear_forward.1} parent=1 // pred_check
      _
    $region3: #{linear_forward.1} parent=1 // pred_check_branch
      %10 = sbr.rel (0) target = $region5
    $region4: #{linear_forward.1} parent=1 // pred_region
      _
    $region5: #{linear_forward.1} parent=1 // pred_fallthru
      _
    // Predicated region
    $region6: #{linear_forward.1} parent=1 // pred_check
      _
    $region7: #{linear_forward.1} parent=1 // pred_check_branch
      %12 = sbr.rel (0) target = $region9
    $region8: #{linear_forward.1} parent=1 // pred_region
      _
    $region9: #{linear_forward.1} parent=1 // pred_fallthru
      _
    // Predicated region
    $region10: #{linear_forward.1} parent=1 // pred_check
      _
    $region11: #{linear_forward.1} parent=1 // pred_check_branch
      %14 = sbr.rel (0) target = $region13
    $region12: #{linear_forward.1} parent=1 // pred_region
      _
    $region13: #{linear_forward.1} parent=1 // pred_fallthru
      _
    %v15 = vld [vmem:[%s0] sm:$0xff]
    %v16 = vld [vmem:[%s1] sm:$0xff]
    %v17 = vld [vmem:[%s1 + $0x8] sm:$0xff]
    %v18 = vld [vmem:[%s1 + $0x10] sm:$0xff]
    %v19 = vld [vmem:[%s1 + $0x18] sm:$0xff]
    %v20 = vld [vmem:[%s1 + $0x20] sm:$0xff]
    %v21 = vld [vmem:[%s1 + $0x28] sm:$0xff]
    %v22 = vld [vmem:[%s1 + $0x30] sm:$0xff]
    %v23 = vld [vmem:[%s1 + $0x38] sm:$0xff]
    %v24 = vld [vmem:[%s1 + $0x40] sm:$0xff]
    %v25 = vld [vmem:[%s1 + $0x48] sm:$0xff]
    %v26 = vld [vmem:[%s1 + $0x50] sm:$0xff]
    %v27 = vld [vmem:[%s1 + $0x58] sm:$0xff]
    %v28 = vld [vmem:[%s1 + $0x60] sm:$0xff]
    %v29 = vld [vmem:[%s1 + $0x68] sm:$0xff]
    %v30 = vld [vmem:[%s1 + $0x70] sm:$0xff]
    %v31 = vld [vmem:[%s1 + $0x78] sm:$0xff]
    %v32 = vld [vmem:[%s2] sm:$0x1]
    %v34 = vlaneseq
    %v35 = vshrl.u32 %v34, 7
    %v36 = vsub.s32 0, %v35
    %v37 = vrot.slane %v32, %v36
    %39 = vmatprep.subr.mxu0 0.0
    %40 = vmatpush1.xpose.msra.mxu0 %v31
    %41 = vmatprep.subr.mxu0 0.0
    %42 = vmatpush1.xpose.msra.mxu0 %v30
    %43 = vmatprep.subr.mxu0 0.0
    %44 = vmatpush1.xpose.msra.mxu0 %v29
    %45 = vmatprep.subr.mxu0 0.0
    %46 = vmatpush1.xpose.msra.mxu0 %v28
    %47 = vmatprep.subr.mxu0 0.0
    %48 = vmatpush1.xpose.msra.mxu0 %v27
    %49 = vmatprep.subr.mxu0 0.0
    %50 = vmatpush1.xpose.msra.mxu0 %v26
    %51 = vmatprep.subr.mxu0 0.0
    %52 = vmatpush1.xpose.msra.mxu0 %v25
    %53 = vmatprep.subr.mxu0 0.0
    %54 = vmatpush1.xpose.msra.mxu0 %v24
    %55 = vmatprep.subr.mxu0 0.0
    %56 = vmatpush1.xpose.msra.mxu0 %v23
    %57 = vmatprep.subr.mxu0 0.0
    %58 = vmatpush1.xpose.msra.mxu0 %v22
    %59 = vmatprep.subr.mxu0 0.0
    %60 = vmatpush1.xpose.msra.mxu0 %v21
    %61 = vmatprep.subr.mxu0 0.0
    %62 = vmatpush1.xpose.msra.mxu0 %v20
    %63 = vmatprep.subr.mxu0 0.0
    %64 = vmatpush1.xpose.msra.mxu0 %v19
    %65 = vmatprep.subr.mxu0 0.0
    %66 = vmatpush1.xpose.msra.mxu0 %v18
    %67 = vmatprep.subr.mxu0 0.0
    %68 = vmatpush1.xpose.msra.mxu0 %v17
    %69 = vmatprep.subr.mxu0 0.0
    %70 = vmatpush1.xpose.msra.mxu0 %v16
    %71 = vmatprep.subr.mxu0 0.0
    %72 = vmatpush2.xpose.msra.mxu0 0.0
    %73 = vmatprep.subr.mxu0 0.0
    %74 = vmatpush2.xpose.msra.mxu0 0.0
    %75 = vmatprep.subr.mxu0 0.0
    %76 = vmatpush2.xpose.msra.mxu0 0.0
    %77 = vmatprep.subr.mxu0 0.0
    %78 = vmatpush2.xpose.msra.mxu0 0.0
    %79 = vmatprep.subr.mxu0 0.0
    %80 = vmatpush2.xpose.msra.mxu0 0.0
    %81 = vmatprep.subr.mxu0 0.0
    %82 = vmatpush2.xpose.msra.mxu0 0.0
    %83 = vmatprep.subr.mxu0 0.0
    %84 = vmatpush2.xpose.msra.mxu0 0.0
    %85 = vmatprep.subr.mxu0 0.0
    %86 = vmatpush2.xpose.msra.mxu0 0.0
    %87 = vmatprep.subr.mxu0 0.0
    %88 = vmatpush2.xpose.msra.mxu0 0.0
    %89 = vmatprep.subr.mxu0 0.0
    %90 = vmatpush2.xpose.msra.mxu0 0.0
    %91 = vmatprep.subr.mxu0 0.0
    %92 = vmatpush2.xpose.msra.mxu0 0.0
    %93 = vmatprep.subr.mxu0 0.0
    %94 = vmatpush2.xpose.msra.mxu0 0.0
    %95 = vmatprep.subr.mxu0 0.0
    %96 = vmatpush2.xpose.msra.mxu0 0.0
    %97 = vmatprep.subr.mxu0 0.0
    %98 = vmatpush2.xpose.msra.mxu0 0.0
    %99 = vmatprep.subr.mxu0 0.0
    %100 = vmatpush2.xpose.msra.mxu0 0.0
    %101 = vmatprep.subr.mxu0 0.0
    %102 = vmatpush2.xpose.msra.mxu0 0.0
    %103 = vmatprep.mubr.f32.mxu0 0.0
    %104 = vmatmul.mubr.f32.gmra.mxu0 %v15
    %v105 = vpop.f32.mrf.mxu0
    %v106 = vadd.f32 %v37, %v105
    %v107 = vpop.f32.mrf.mxu0
    %108 = vdwg.mxu0
    %109 = vst [vmem:[#allocation2] sm:$0xff] %v106
    // Predicated region
    $region14: #{linear_forward.1} parent=1 // pred_check
      _
    $region15: #{linear_forward.1} parent=1 // pred_check_branch
      %111 = sbr.rel (0) target = $region17
    $region16: #{linear_forward.1} parent=1 // pred_region
      %s113 = ssub.s32 128, 128
      %114 = vsyncadd [#allocation3], %s113
      %s116 = sshll.u32 [#allocation2], 4
      %s117 = int_to_ptr.vmem [resolvable:$true] %s116
      %119 = dma.vmem_to_hbm [thread:$0]  %s117, 128, %s3, [#allocation3]
    $region17: #{linear_forward.1} parent=1 // pred_fallthru
      _
    // Predicated region
    $region18: #{linear_forward.1} parent=1 // pred_check
      _
    $region19: #{linear_forward.1} parent=1 // pred_check_branch
      %121 = sbr.rel (0) target = $region21
    $region20: #{linear_forward.1} parent=1 // pred_region
      %122 = dma.done [#allocation3], 128
    $region21: #{linear_forward.1} parent=1 // pred_fallthru
      _
    %123 = vsyncpa [#allocation3], 1

</llo_original>
